<compile_context>
chip_gen: v6e
topology: v6e:2x2x1
jax: 0.10.0
libtpu: 0.0.40
codegen_flags: <defaults>
</compile_context>

<pallas_src>
from functools import lru_cache, partial

import numpy as np
import jax
import jax.numpy as jnp
from jax.experimental import pallas as pl
from jax.experimental.pallas import tpu as pltpu

# Default 5-point stencil of the module (repeated identically over channels).
_DEFAULT_WEIGHT = [[0.0, 0.25, 0.0],
                   [0.25, 0.0, 0.25],
                   [0.0, 0.25, 0.0]]


@lru_cache(maxsize=None)
def _roll_matches_numpy() -> bool:
    """Pin pltpu.roll's rotation direction against np.roll with one tiny kernel.

    The tap -> lane-shift mapping below depends on this convention; probing it
    once keeps the kernel correct across jax/Mosaic versions.  Runs eagerly;
    call the wrapper once outside jit before jitting it.
    """
    def probe(x_ref, o_ref):
        o_ref[...] = pltpu.roll(x_ref[...], 1, axis=1)

    x = jnp.broadcast_to(jnp.arange(128, dtype=jnp.float32)[None, :], (8, 128))
    out = pl.pallas_call(
        probe, out_shape=jax.ShapeDtypeStruct((8, 128), jnp.float32))(x)
    return bool(out[0, 0] == 127.0)      # np.roll([0..127], 1)[0] == 127


def _tpu_vmem_capacity_bytes() -> int:
    try:
        cap = int(pltpu.get_tpu_info().vmem_capacity_bytes)
    except Exception:                     # conservative fallback (v7x-sized)
        cap = 64 << 20
    return max(cap, 32 << 20)


def _dir_rhs_rec_kernel(ring_ref, u_ref, f_ref, o_ref, *, taps, value, cof):
    _, C, L = u_ref.shape
    f32 = jnp.float32

    ring = ring_ref[...] != 0.0                         # (1, L) Dirichlet ring

    # Channel hoist: the conv weight repeats over channels, so the stencil only
    # ever needs sum_c pad(u)[c]; on the ring that sum is C * value.
    vsum = jnp.sum(u_ref[...].astype(f32), axis=1)      # (Nb, L)
    vsum = jnp.where(ring, C * value, vsum)

    # 3x3 stencil as lane rolls of the summed plane (XLU slot, lane-aligned).
    # Roll wraparound only contaminates ring positions, overwritten below.
    acc = jnp.zeros(vsum.shape, f32)
    for shift, wv in taps:
        shifted = vsum if shift == 0 else pltpu.roll(vsum, shift, axis=1)
        acc = acc + wv * shifted

    # Compose the full block in registers; single lane-dense full-block store.
    interior = acc[:, None, :] + cof * f_ref[...].astype(f32)   # (Nb, C, L)
    out = jnp.where(ring[:, None, :], value, interior)
    o_ref[...] = out.astype(o_ref.dtype)


def dir_rhs_rec(u, f, *, k, h, value, weight=_DEFAULT_WEIGHT, block_n=None):
    """Pallas implementation of Dir_RHS_Rec.forward(u, f).  u, f: (N, C, H, W)."""
    N, C, H, W = u.shape
    if f.shape != u.shape:
        raise ValueError("u and f must have the same shape")
    if H < 3 or W < 3:
        raise ValueError("Dir_RHS_Rec needs at least a 1-pixel interior (H, W >= 3)")
    if len(weight) != 3 or any(len(r) != 3 for r in weight):
        raise ValueError("module semantics assume a 3x3 stencil")

    L = H * W
    cof = -(h ** 2) / (k * 4.0)

    # Map each nonzero stencil tap (a, b) to a flat-lane roll amount on the
    # merged H*W lane axis (offset d = (a-1)*W + (b-1)).
    sign = -1 if _roll_matches_numpy() else 1
    taps = tuple(
        ((sign * ((a - 1) * W + (b - 1))) % L, float(weight[a][b]))
        for a in range(3) for b in range(3) if float(weight[a][b]) != 0.0)

    # Lane-dense (1, H*W) ring mask, built host-side.
    ring_np = np.zeros((H, W), np.float32)
    ring_np[0, :] = ring_np[-1, :] = 1.0
    ring_np[:, 0] = ring_np[:, -1] = 1.0
    ring = jnp.asarray(ring_np.reshape(1, L))

    # Batch-block size: amortize the ~0.35us/step grid overhead and fill the
    # DMA pipe, but keep the double-buffered working set well inside scoped
    # VMEM on every generation (v7x: 64 MiB physical) and keep >=4 grid steps
    # when the batch allows so v7x's second TensorCore is used.
    itemsize = jnp.dtype(u.dtype).itemsize
    per_sample = (3 * 2 * C * L * itemsize        # u, f, out double-buffered
                  + (2 * C + 3) * L * 4)          # in-kernel f32 temporaries
    vmem_cap = _tpu_vmem_capacity_bytes()
    nb_cap = max(1, (vmem_cap // 4) // per_sample)
    if block_n is None:
        block_n = pl.cdiv(N, min(4, N))
    block_n = int(max(1, min(block_n, nb_cap, N)))
    grid = (pl.cdiv(N, block_n),)

    kernel = partial(_dir_rhs_rec_kernel, taps=taps,
                     value=float(value), cof=float(cof))
    data_spec = pl.BlockSpec((block_n, C, L), lambda n: (n, 0, 0))
    out_flat = pl.pallas_call(
        kernel,
        out_shape=jax.ShapeDtypeStruct((N, C, L), u.dtype),
        grid=grid,
        in_specs=[pl.BlockSpec((1, L), lambda n: (0, 0)), data_spec, data_spec],
        out_specs=data_spec,
        compiler_params=pltpu.CompilerParams(
            dimension_semantics=("parallel",),
            vmem_limit_bytes=int(vmem_cap // 2),
        ),
    )(ring, u.reshape(N, C, L), f.reshape(N, C, L))
    # TODO(synk): for W >= 128 workloads a (N, C, H, W) block layout (W on
    # lanes) is equally lane-dense; the flat H*W layout is chosen because the
    # module's typical planes are small (W << 128).
    return out_flat.reshape(N, C, H, W)


def dir_rhs_rec_ref(u, f, k, h, value, weight=_DEFAULT_WEIGHT):
    """Pure-JAX reference mirroring the PyTorch forward exactly."""
    N, C, H, W = u.shape
    w = jnp.asarray(weight, jnp.float32)                   # (3, 3)
    w_oihw = jnp.broadcast_to(w, (C, 3, 3))[None]          # (1, C, 3, 3)
    v_int = u[..., 1:-1, 1:-1]
    vpad = jnp.pad(v_int, ((0, 0), (0, 0), (1, 1), (1, 1)),
                   constant_values=value)
    conv = jax.lax.conv_general_dilated(
        vpad.astype(jnp.float32), w_oihw, window_strides=(1, 1),
        padding="VALID", dimension_numbers=("NCHW", "OIHW", "NCHW"),
        precision=jax.lax.Precision.HIGHEST)               # (N, 1, H-2, W-2)
    cof = -(h ** 2) / (k * 4.0)
    src = (cof * f)[..., 1:-1, 1:-1]
    interior = conv + src                                  # broadcast over C
    return vpad.at[..., 1:-1, 1:-1].set(interior.astype(u.dtype))


if __name__ == "__main__":
    key = jax.random.PRNGKey(0)
    k1, k2, k3, k4 = jax.random.split(key, 4)

    # Case 1: module defaults (in_channels=1, symmetric 5-point stencil).
    N, C, H, W = 8, 1, 16, 16
    u = jax.random.normal(k1, (N, C, H, W), jnp.float32)
    f = jax.random.normal(k2, (N, C, H, W), jnp.float32)
    k_coef, h_coef, value = 2.0, 0.1, 0.5
    out = jax.block_until_ready(dir_rhs_rec(u, f, k=k_coef, h=h_coef, value=value))
    ref = dir_rhs_rec_ref(u, f, k_coef, h_coef, value)
    assert out.shape == (N, C, H, W)
    np.testing.assert_allclose(np.asarray(out), np.asarray(ref),
                               rtol=1e-5, atol=1e-5)

    # Case 2: multi-channel, asymmetric stencil, batch not divisible by the
    # batch block (exercises channel-sum hoist, roll direction, partial block).
    w_asym = [[0.05, 0.20, 0.00],
              [0.30, 0.00, 0.25],
              [0.00, 0.15, 0.05]]
    N2, C2 = 5, 3
    u2 = jax.random.normal(k3, (N2, C2, H, W), jnp.float32)
    f2 = jax.random.normal(k4, (N2, C2, H, W), jnp.float32)
    out2 = jax.block_until_ready(
        dir_rhs_rec(u2, f2, k=1.5, h=0.2, value=-0.25, weight=w_asym))
    ref2 = dir_rhs_rec_ref(u2, f2, 1.5, 0.2, -0.25, weight=w_asym)
    np.testing.assert_allclose(np.asarray(out2), np.asarray(ref2),
                               rtol=1e-5, atol=1e-5)

    print("KERNEL_OK")
</pallas_src>

<mosaic_0001>
module attributes {stable_mosaic.version = 11 : i64} {
  func.func @probe(%arg0: memref<8x128xf32, #tpu.memory_space<vmem>>, %arg1: memref<8x128xf32, #tpu.memory_space<vmem>>) attributes {dimension_semantics = [], scalar_prefetch = 0 : i64, scratch_operands = 0 : i64, tpu.core_type = #tpu.core_type<tc>} {
    %c0 = arith.constant 0 : index
    %c0_0 = arith.constant 0 : index
    %0 = vector.load %arg0[%c0, %c0_0] : memref<8x128xf32, #tpu.memory_space<vmem>>, vector<8x128xf32>
    %c1_i32 = arith.constant 1 : i32
    %1 = tpu.dynamic_rotate %0 by %c1_i32 dim 1 : vector<8x128xf32>, i32 -> vector<8x128xf32>
    %c0_1 = arith.constant 0 : index
    %c0_2 = arith.constant 0 : index
    %2 = vector.load %arg1[%c0_1, %c0_2] : memref<8x128xf32, #tpu.memory_space<vmem>>, vector<8x128xf32>
    tpu.vector_store %arg1[%c0_1, %c0_2], %1 {strides = array<i32>} : memref<8x128xf32, #tpu.memory_space<vmem>>, vector<8x128xf32>,
    return
  }
}

</mosaic_0001>

<llo_original>
// kernel: tpu_custom_call.1
$region0: #{tpu_custom_call.1}
  #allocation0 [shape = 'u32[]', space=smem, size = 0x4, offset = 0x4, fixed_abs, tag = 'smem constant byte address 0x4 - core index']
  #allocation1 [shape = 'u32[144,128]{1,0:T(1,128)}', space=vmem, size = 0x12000, scoped, tag = 'internal scratch']
  %s0 = inlined_call_operand.hbm [shape: f32[8,128], index: 0, kind: input, shape index: {}]
  %s1 = inlined_call_operand.hbm [shape: f32[8,128], index: 1, kind: output, shape index: {}]
  %s2 = sld [smem:[#allocation0]]
  $region18: #{tpu_custom_call.1} parent=0
    _
  %s4 = ssub.s32 1, %s2
  %s5 = scalar_select 0, %s4, %s2
  $region1: #{tpu_custom_call.1} parent=0
    #allocation2 [shape = 'u8[4096]{0}', space=vmem, size = 0x1000, scoped, tag = 'input window, operand 0, single buffered']
    #allocation3 [shape = 's32[1]{0}', space=sflag, size = 0x4, scoped, tag = 'scoped memory for tpu_custom_call.1']
    #allocation4 [shape = 's32[1]{0}', space=sflag, size = 0x4, scoped, tag = 'scoped memory for tpu_custom_call.1']
    #allocation5 [shape = 'u8[4096]{0}', space=vmem, size = 0x1000, scoped, tag = 'output window, operand 0, single buffered']
    %6 = vsyncpa [#allocation3], 0
    %7 = vsyncpa [#allocation4], 0
    // Predicated region
    $region2: #{tpu_custom_call.1} parent=1 // pred_check
      _
    $region3: #{tpu_custom_call.1} parent=1 // pred_check_branch
      %9 = sbr.rel (0) target = $region5
    $region4: #{tpu_custom_call.1} parent=1 // pred_region
      %s11 = ssub.s32 128, 128
      %12 = vsyncadd [#allocation3], %s11
      %s14 = sshll.u32 [#allocation2], 4
      %s15 = int_to_ptr.vmem [resolvable:$true] %s14
      %17 = dma.hbm_to_vmem [thread:$0]  %s0, 128, %s15, [#allocation3]
    $region5: #{tpu_custom_call.1} parent=1 // pred_fallthru
      _
    // Predicated region
    $region6: #{tpu_custom_call.1} parent=1 // pred_check
      _
    $region7: #{tpu_custom_call.1} parent=1 // pred_check_branch
      %19 = sbr.rel (0) target = $region9
    $region8: #{tpu_custom_call.1} parent=1 // pred_region
      %20 = dma.done [#allocation3], 128
    $region9: #{tpu_custom_call.1} parent=1 // pred_fallthru
      _
    %v21 = vld [vmem:[#allocation2] sm:$0xff]
    %22 = vrot.lane.b32.xlu0 %v21, 1
    %v23 = vpop.permute.xlu0 %22
    %24 = vst [vmem:[#allocation5] sm:$0xff] %v23
    // Predicated region
    $region10: #{tpu_custom_call.1} parent=1 // pred_check
      _
    $region11: #{tpu_custom_call.1} parent=1 // pred_check_branch
      %26 = sbr.rel (0) target = $region13
    $region12: #{tpu_custom_call.1} parent=1 // pred_region
      %s28 = ssub.s32 128, 128
      %29 = vsyncadd [#allocation4], %s28
      %s31 = sshll.u32 [#allocation5], 4
      %s32 = int_to_ptr.vmem [resolvable:$true] %s31
      %34 = dma.vmem_to_hbm [thread:$0]  %s32, 128, %s1, [#allocation4]
    $region13: #{tpu_custom_call.1} parent=1 // pred_fallthru
      _
    // Predicated region
    $region14: #{tpu_custom_call.1} parent=1 // pred_check
      _
    $region15: #{tpu_custom_call.1} parent=1 // pred_check_branch
      %36 = sbr.rel (0) target = $region17
    $region16: #{tpu_custom_call.1} parent=1 // pred_region
      %37 = dma.done [#allocation4], 128
    $region17: #{tpu_custom_call.1} parent=1 // pred_fallthru
      _
    %38 = vsyncpa [#allocation3], 1
    %39 = vsyncpa [#allocation4], 1

</llo_original>
